<compile_context>
chip_gen: v7x
topology: tpu7x:2x2x1
jax: 0.10.0
libtpu: 0.0.40
codegen_flags: <defaults>
</compile_context>

<pallas_src>
import jax
import jax.numpy as jnp
from jax.experimental import pallas as pl
from jax.experimental.pallas import tpu as pltpu


HIDDEN = 50    # matches FunctionNet(hidden_size=50)
HPAD = 128     # lane-dense padded hidden size


def _mlp_kernel(x_ref,
                w1_ref, b1_ref,
                w2_ref, b2_ref,
                w3_ref, b3_ref,
                w4_ref, b4_ref,
                w5t_ref, b5_ref,
                o_ref):
    x = x_ref[...]                                                # (TB, 1)

    # Layer 1: Linear(1,H) is a rank-1 outer product -> pure VPU broadcast.
    h = jnp.maximum(x * w1_ref[...] + b1_ref[...], 0.0)          # (TB, HPAD)

    # Layers 2-4: dense lane-full 128x128 MXU matmuls, f32 accumulation.
    h = jnp.maximum(
        jnp.dot(h, w2_ref[...], preferred_element_type=jnp.float32) + b2_ref[...], 0.0)
    h = jnp.maximum(
        jnp.dot(h, w3_ref[...], preferred_element_type=jnp.float32) + b3_ref[...], 0.0)
    h = jnp.maximum(
        jnp.dot(h, w4_ref[...], preferred_element_type=jnp.float32) + b4_ref[...], 0.0)

    # Layer 5: Linear(H,1) as VPU multiply + lane reduce (avoids a tiny MXU op).
    y = jnp.sum(h * w5t_ref[...], axis=-1, keepdims=True) + b5_ref[...]   # (TB, 1)
    o_ref[...] = y.astype(o_ref.dtype)


def _pad_params(params, hpad=HPAD):
    """Zero-pad the hidden dimension to `hpad` (padded lanes stay exactly 0
    through bias+ReLU, so the forward pass is numerically identical)."""
    (w1, b1), (w2, b2), (w3, b3), (w4, b4), (w5, b5) = params

    def pad_cols(a):
        return jnp.pad(a, ((0, 0), (0, hpad - a.shape[1])))

    def pad_both(a):
        return jnp.pad(a, ((0, hpad - a.shape[0]), (0, hpad - a.shape[1])))

    w1p, b1p = pad_cols(w1), pad_cols(b1)          # (1,128), (1,128)
    w2p, b2p = pad_both(w2), pad_cols(b2)          # (128,128), (1,128)
    w3p, b3p = pad_both(w3), pad_cols(b3)
    w4p, b4p = pad_both(w4), pad_cols(b4)
    w5tp = pad_cols(w5.T)                          # (1,128)  (transposed for VPU reduce)
    b5p = b5                                       # (1,1)
    return (w1p, b1p, w2p, b2p, w3p, b3p, w4p, b4p, w5tp, b5p)


def function_net_forward(x, params, *, tile_b=None):
    """x: (B, 1) float32. params: list of (W, b) with W (in, out), b (1, out)."""
    B = x.shape[0]
    if tile_b is None:
        # Whole batch in a single grid step: per-step overhead (~0.35 us) paid once.
        tile_b = B
    assert B % tile_b == 0, "batch must be divisible by batch tile"

    padded = _pad_params(params)
    H = params[0][0].shape[1]

    grid = (B // tile_b,)
    in_specs = [pl.BlockSpec((tile_b, 1), lambda i: (i, 0))]
    for arr in padded:
        # Full-array blocks with constant index -> weights stay resident in VMEM.
        in_specs.append(pl.BlockSpec(arr.shape, lambda i: (0, 0)))
    out_spec = pl.BlockSpec((tile_b, 1), lambda i: (i, 0))

    flops = 2 * B * (H + 3 * H * H + H)
    bytes_accessed = 4 * (x.size + B + sum(int(a.size) for a in padded))

    return pl.pallas_call(
        _mlp_kernel,
        out_shape=jax.ShapeDtypeStruct((B, 1), jnp.float32),
        grid=grid,
        in_specs=in_specs,
        out_specs=out_spec,
        compiler_params=pltpu.CompilerParams(
            dimension_semantics=("parallel",)),
        cost_estimate=pl.CostEstimate(
            flops=flops, transcendentals=0, bytes_accessed=bytes_accessed),
    )(x, *padded)


def init_params(key, hidden=HIDDEN):
    """Deterministic init mimicking torch.nn.Linear default:
    U(-1/sqrt(fan_in), 1/sqrt(fan_in)) for both W and b."""
    dims = [(1, hidden), (hidden, hidden), (hidden, hidden),
            (hidden, hidden), (hidden, 1)]
    params = []
    for (fan_in, fan_out) in dims:
        key, kw, kb = jax.random.split(key, 3)
        bound = 1.0 / jnp.sqrt(jnp.float32(fan_in))
        w = jax.random.uniform(kw, (fan_in, fan_out), jnp.float32,
                               minval=-bound, maxval=bound)
        b = jax.random.uniform(kb, (1, fan_out), jnp.float32,
                               minval=-bound, maxval=bound)
        params.append((w, b))
    return params


def reference_forward(x, params):
    h = x
    for i, (w, b) in enumerate(params):
        h = h @ w + b
        if i < len(params) - 1:
            h = jnp.maximum(h, 0.0)
    return h


if __name__ == "__main__":
    key = jax.random.PRNGKey(0)
    key, kx = jax.random.split(key)

    B = 64  # batch of scalar inputs, shape (B, 1) like the PyTorch module expects
    x = jax.random.uniform(kx, (B, 1), jnp.float32, minval=-10.0, maxval=10.0)

    params = init_params(jax.random.PRNGKey(0))

    out = function_net_forward(x, params)           # single grid step (tile_b = B)
    out = jax.block_until_ready(out)

    ref = reference_forward(x, params)
    assert out.shape == (B, 1)
    assert jnp.allclose(out, ref, atol=1e-4, rtol=1e-4), "mismatch vs reference"

    # TODO(synk): FunctionNet.evaluate (Simpson-quadrature integration via torchquad)
    # is host-side numerics around the forward pass and is not implemented as a kernel.
    print("KERNEL_OK")
</pallas_src>

<mosaic_0001>
module attributes {stable_mosaic.version = 11 : i64} {
  func.func @_mlp_kernel(%arg0: i32, %arg1: memref<64x1xf32, #tpu.memory_space<vmem>>, %arg2: memref<1x128xf32, #tpu.memory_space<vmem>>, %arg3: memref<1x128xf32, #tpu.memory_space<vmem>>, %arg4: memref<128x128xf32, #tpu.memory_space<vmem>>, %arg5: memref<1x128xf32, #tpu.memory_space<vmem>>, %arg6: memref<128x128xf32, #tpu.memory_space<vmem>>, %arg7: memref<1x128xf32, #tpu.memory_space<vmem>>, %arg8: memref<128x128xf32, #tpu.memory_space<vmem>>, %arg9: memref<1x128xf32, #tpu.memory_space<vmem>>, %arg10: memref<1x128xf32, #tpu.memory_space<vmem>>, %arg11: memref<1x1xf32, #tpu.memory_space<vmem>>, %arg12: memref<64x1xf32, #tpu.memory_space<vmem>>) attributes {dimension_semantics = [#tpu.dimension_semantics<parallel>], iteration_bounds = array<i64: 1>, scalar_prefetch = 0 : i64, scratch_operands = 0 : i64, tpu.core_type = #tpu.core_type<tc>, window_params = [{transform_indices = @transform_0, window_bounds = array<i64: 64, 1>}, {pipeline_mode = #tpu.pipeline_mode<synchronous>, transform_indices = @transform_1, window_bounds = array<i64: 1, 128>}, {pipeline_mode = #tpu.pipeline_mode<synchronous>, transform_indices = @transform_2, window_bounds = array<i64: 1, 128>}, {pipeline_mode = #tpu.pipeline_mode<synchronous>, transform_indices = @transform_3, window_bounds = array<i64: 128, 128>}, {pipeline_mode = #tpu.pipeline_mode<synchronous>, transform_indices = @transform_4, window_bounds = array<i64: 1, 128>}, {pipeline_mode = #tpu.pipeline_mode<synchronous>, transform_indices = @transform_5, window_bounds = array<i64: 128, 128>}, {pipeline_mode = #tpu.pipeline_mode<synchronous>, transform_indices = @transform_6, window_bounds = array<i64: 1, 128>}, {pipeline_mode = #tpu.pipeline_mode<synchronous>, transform_indices = @transform_7, window_bounds = array<i64: 128, 128>}, {pipeline_mode = #tpu.pipeline_mode<synchronous>, transform_indices = @transform_8, window_bounds = array<i64: 1, 128>}, {pipeline_mode = #tpu.pipeline_mode<synchronous>, transform_indices = @transform_9, window_bounds = array<i64: 1, 128>}, {pipeline_mode = #tpu.pipeline_mode<synchronous>, transform_indices = @transform_10, window_bounds = array<i64: 1, 1>}, {transform_indices = @transform_11, window_bounds = array<i64: 64, 1>}]} {
    %c0 = arith.constant 0 : index
    %c0_0 = arith.constant 0 : index
    %0 = vector.load %arg1[%c0, %c0_0] : memref<64x1xf32, #tpu.memory_space<vmem>>, vector<64x1xf32>
    %c0_1 = arith.constant 0 : index
    %c0_2 = arith.constant 0 : index
    %1 = vector.load %arg2[%c0_1, %c0_2] : memref<1x128xf32, #tpu.memory_space<vmem>>, vector<1x128xf32>
    %2 = vector.broadcast %0 : vector<64x1xf32> to vector<64x128xf32>
    %3 = vector.broadcast %1 : vector<1x128xf32> to vector<64x128xf32>
    %4 = arith.mulf %2, %3 : vector<64x128xf32>
    %c0_3 = arith.constant 0 : index
    %c0_4 = arith.constant 0 : index
    %5 = vector.load %arg3[%c0_3, %c0_4] : memref<1x128xf32, #tpu.memory_space<vmem>>, vector<1x128xf32>
    %6 = vector.broadcast %5 : vector<1x128xf32> to vector<64x128xf32>
    %7 = arith.addf %4, %6 : vector<64x128xf32>
    %cst = arith.constant 0.000000e+00 : f32
    %8 = vector.broadcast %cst : f32 to vector<64x128xf32>
    %9 = arith.maximumf %7, %8 : vector<64x128xf32>
    %c0_5 = arith.constant 0 : index
    %c0_6 = arith.constant 0 : index
    %10 = vector.load %arg4[%c0_5, %c0_6] : memref<128x128xf32, #tpu.memory_space<vmem>>, vector<128x128xf32>
    %cst_7 = arith.constant dense<0.000000e+00> : vector<64x128xf32>
    %11 = tpu.matmul %9, %10, %cst_7 {dimension_numbers = #tpu.dot_dimension_numbers<[1], [0], [0], [1], [0, 0, 1, 1], [], []>} : vector<64x128xf32>, vector<128x128xf32>, vector<64x128xf32> -> vector<64x128xf32>
    %c0_8 = arith.constant 0 : index
    %c0_9 = arith.constant 0 : index
    %12 = vector.load %arg5[%c0_8, %c0_9] : memref<1x128xf32, #tpu.memory_space<vmem>>, vector<1x128xf32>
    %13 = vector.broadcast %12 : vector<1x128xf32> to vector<64x128xf32>
    %14 = arith.addf %11, %13 : vector<64x128xf32>
    %cst_10 = arith.constant 0.000000e+00 : f32
    %15 = vector.broadcast %cst_10 : f32 to vector<64x128xf32>
    %16 = arith.maximumf %14, %15 : vector<64x128xf32>
    %c0_11 = arith.constant 0 : index
    %c0_12 = arith.constant 0 : index
    %17 = vector.load %arg6[%c0_11, %c0_12] : memref<128x128xf32, #tpu.memory_space<vmem>>, vector<128x128xf32>
    %cst_13 = arith.constant dense<0.000000e+00> : vector<64x128xf32>
    %18 = tpu.matmul %16, %17, %cst_13 {dimension_numbers = #tpu.dot_dimension_numbers<[1], [0], [0], [1], [0, 0, 1, 1], [], []>} : vector<64x128xf32>, vector<128x128xf32>, vector<64x128xf32> -> vector<64x128xf32>
    %c0_14 = arith.constant 0 : index
    %c0_15 = arith.constant 0 : index
    %19 = vector.load %arg7[%c0_14, %c0_15] : memref<1x128xf32, #tpu.memory_space<vmem>>, vector<1x128xf32>
    %20 = vector.broadcast %19 : vector<1x128xf32> to vector<64x128xf32>
    %21 = arith.addf %18, %20 : vector<64x128xf32>
    %cst_16 = arith.constant 0.000000e+00 : f32
    %22 = vector.broadcast %cst_16 : f32 to vector<64x128xf32>
    %23 = arith.maximumf %21, %22 : vector<64x128xf32>
    %c0_17 = arith.constant 0 : index
    %c0_18 = arith.constant 0 : index
    %24 = vector.load %arg8[%c0_17, %c0_18] : memref<128x128xf32, #tpu.memory_space<vmem>>, vector<128x128xf32>
    %cst_19 = arith.constant dense<0.000000e+00> : vector<64x128xf32>
    %25 = tpu.matmul %23, %24, %cst_19 {dimension_numbers = #tpu.dot_dimension_numbers<[1], [0], [0], [1], [0, 0, 1, 1], [], []>} : vector<64x128xf32>, vector<128x128xf32>, vector<64x128xf32> -> vector<64x128xf32>
    %c0_20 = arith.constant 0 : index
    %c0_21 = arith.constant 0 : index
    %26 = vector.load %arg9[%c0_20, %c0_21] : memref<1x128xf32, #tpu.memory_space<vmem>>, vector<1x128xf32>
    %27 = vector.broadcast %26 : vector<1x128xf32> to vector<64x128xf32>
    %28 = arith.addf %25, %27 : vector<64x128xf32>
    %cst_22 = arith.constant 0.000000e+00 : f32
    %29 = vector.broadcast %cst_22 : f32 to vector<64x128xf32>
    %30 = arith.maximumf %28, %29 : vector<64x128xf32>
    %c0_23 = arith.constant 0 : index
    %c0_24 = arith.constant 0 : index
    %31 = vector.load %arg10[%c0_23, %c0_24] : memref<1x128xf32, #tpu.memory_space<vmem>>, vector<1x128xf32>
    %32 = vector.broadcast %31 : vector<1x128xf32> to vector<64x128xf32>
    %33 = arith.mulf %30, %32 : vector<64x128xf32>
    %cst_25 = arith.constant dense<0.000000e+00> : vector<64xf32>
    %34 = vector.multi_reduction <add>, %33, %cst_25 [1] : vector<64x128xf32> to vector<64xf32>
    %35 = vector.shape_cast %34 : vector<64xf32> to vector<64x1xf32>
    %c0_26 = arith.constant 0 : index
    %c0_27 = arith.constant 0 : index
    %36 = vector.load %arg11[%c0_26, %c0_27] : memref<1x1xf32, #tpu.memory_space<vmem>>, vector<1x1xf32>
    %37 = vector.broadcast %36 : vector<1x1xf32> to vector<64x1xf32>
    %38 = arith.addf %35, %37 : vector<64x1xf32>
    %c0_28 = arith.constant 0 : index
    %c0_29 = arith.constant 0 : index
    %39 = vector.load %arg12[%c0_28, %c0_29] : memref<64x1xf32, #tpu.memory_space<vmem>>, vector<64x1xf32>
    tpu.vector_store %arg12[%c0_28, %c0_29], %38 {strides = array<i32>} : memref<64x1xf32, #tpu.memory_space<vmem>>, vector<64x1xf32>,
    return
  }
  func.func @transform_0(%arg0: i32) -> (i32, i32) {
    %c0_i32 = arith.constant 0 : i32
    %c0_i32_0 = arith.constant 0 : i32
    return %arg0, %c0_i32 : i32, i32
  }
  func.func @transform_1(%arg0: i32) -> (i32, i32) {
    %c0_i32 = arith.constant 0 : i32
    %c0_i32_0 = arith.constant 0 : i32
    %c0_i32_1 = arith.constant 0 : i32
    return %c0_i32, %c0_i32_0 : i32, i32
  }
  func.func @transform_2(%arg0: i32) -> (i32, i32) {
    %c0_i32 = arith.constant 0 : i32
    %c0_i32_0 = arith.constant 0 : i32
    %c0_i32_1 = arith.constant 0 : i32
    return %c0_i32, %c0_i32_0 : i32, i32
  }
  func.func @transform_3(%arg0: i32) -> (i32, i32) {
    %c0_i32 = arith.constant 0 : i32
    %c0_i32_0 = arith.constant 0 : i32
    %c0_i32_1 = arith.constant 0 : i32
    return %c0_i32, %c0_i32_0 : i32, i32
  }
  func.func @transform_4(%arg0: i32) -> (i32, i32) {
    %c0_i32 = arith.constant 0 : i32
    %c0_i32_0 = arith.constant 0 : i32
    %c0_i32_1 = arith.constant 0 : i32
    return %c0_i32, %c0_i32_0 : i32, i32
  }
  func.func @transform_5(%arg0: i32) -> (i32, i32) {
    %c0_i32 = arith.constant 0 : i32
    %c0_i32_0 = arith.constant 0 : i32
    %c0_i32_1 = arith.constant 0 : i32
    return %c0_i32, %c0_i32_0 : i32, i32
  }
  func.func @transform_6(%arg0: i32) -> (i32, i32) {
    %c0_i32 = arith.constant 0 : i32
    %c0_i32_0 = arith.constant 0 : i32
    %c0_i32_1 = arith.constant 0 : i32
    return %c0_i32, %c0_i32_0 : i32, i32
  }
  func.func @transform_7(%arg0: i32) -> (i32, i32) {
    %c0_i32 = arith.constant 0 : i32
    %c0_i32_0 = arith.constant 0 : i32
    %c0_i32_1 = arith.constant 0 : i32
    return %c0_i32, %c0_i32_0 : i32, i32
  }
  func.func @transform_8(%arg0: i32) -> (i32, i32) {
    %c0_i32 = arith.constant 0 : i32
    %c0_i32_0 = arith.constant 0 : i32
    %c0_i32_1 = arith.constant 0 : i32
    return %c0_i32, %c0_i32_0 : i32, i32
  }
  func.func @transform_9(%arg0: i32) -> (i32, i32) {
    %c0_i32 = arith.constant 0 : i32
    %c0_i32_0 = arith.constant 0 : i32
    %c0_i32_1 = arith.constant 0 : i32
    return %c0_i32, %c0_i32_0 : i32, i32
  }
  func.func @transform_10(%arg0: i32) -> (i32, i32) {
    %c0_i32 = arith.constant 0 : i32
    %c0_i32_0 = arith.constant 0 : i32
    %c0_i32_1 = arith.constant 0 : i32
    return %c0_i32, %c0_i32_0 : i32, i32
  }
  func.func @transform_11(%arg0: i32) -> (i32, i32) {
    %c0_i32 = arith.constant 0 : i32
    %c0_i32_0 = arith.constant 0 : i32
    return %arg0, %c0_i32 : i32, i32
  }
}

</mosaic_0001>

<llo_original>
// kernel: tpu_custom_call.1
$region0: #{tpu_custom_call.1}
  #allocation0 [shape = 'u32[]', space=smem, size = 0x4, offset = 0x4, fixed_abs, tag = 'smem constant byte address 0x4 - core index']
  #allocation1 [shape = 'u32[144,128]{1,0:T(1,128)}', space=vmem, size = 0x12000, scoped, tag = 'internal scratch']
  #allocation2 [shape = 'f32[1,1]{1,0:T(1,128)S(1)}', space=vmem, size = 0x200, scoped, tag = 'scoped memory for tpu_custom_call.1']
  %s0 = inlined_call_operand.vmem [shape: f32[64,1], index: 0, kind: input, shape index: {}]
  %s1 = inlined_call_operand.vmem [shape: f32[1,128], index: 1, kind: input, shape index: {}]
  %s2 = inlined_call_operand.vmem [shape: f32[1,128], index: 2, kind: input, shape index: {}]
  %s3 = inlined_call_operand.hbm [shape: f32[128,128], index: 3, kind: input, shape index: {}]
  %s4 = inlined_call_operand.vmem [shape: f32[1,128], index: 4, kind: input, shape index: {}]
  %s5 = inlined_call_operand.hbm [shape: f32[128,128], index: 5, kind: input, shape index: {}]
  %s6 = inlined_call_operand.vmem [shape: f32[1,128], index: 6, kind: input, shape index: {}]
  %s7 = inlined_call_operand.hbm [shape: f32[128,128], index: 7, kind: input, shape index: {}]
  %s8 = inlined_call_operand.vmem [shape: f32[1,128], index: 8, kind: input, shape index: {}]
  %s9 = inlined_call_operand.vmem [shape: f32[1,128], index: 9, kind: input, shape index: {}]
  %s10 = inlined_call_operand.<no memory space> [shape: f32[1,1], index: 10, kind: input, shape index: {}]
  %s11 = inlined_call_operand.vmem [shape: f32[64,1], index: 11, kind: output, shape index: {}]
  %s12 = sld [smem:[#allocation0]]
  $region66: #{tpu_custom_call.1} parent=0
    _
  %s14 = ssub.s32 1, %s12
  %s15 = scalar_select 0, %s14, %s12
  %v16 = vstv %s10
  %17 = vst [vmem:[#allocation2] sm:$0x1] %v16
  $region1: #{tpu_custom_call.1} parent=0
    #allocation3 [shape = 'u8[65536]{0}', space=vmem, size = 0x10000, scoped, tag = 'input window, operand 3, single buffered']
    #allocation4 [shape = 's32[1]{0}', space=sflag, size = 0x4, scoped, tag = 'scoped memory for tpu_custom_call.1']
    #allocation5 [shape = 'u8[65536]{0}', space=vmem, size = 0x10000, scoped, tag = 'input window, operand 5, single buffered']
    #allocation6 [shape = 's32[1]{0}', space=sflag, size = 0x4, scoped, tag = 'scoped memory for tpu_custom_call.1']
    #allocation7 [shape = 'u8[65536]{0}', space=vmem, size = 0x10000, scoped, tag = 'input window, operand 7, single buffered']
    %18 = vsyncpa [#allocation4], 0
    %19 = vsyncpa [#allocation6], 0
    // Predicated region
    $region2: #{tpu_custom_call.1} parent=1 // pred_check
      _
    $region3: #{tpu_custom_call.1} parent=1 // pred_check_branch
      %21 = sbr.rel (0) target = $region5
    $region4: #{tpu_custom_call.1} parent=1 // pred_region
      _
    $region5: #{tpu_custom_call.1} parent=1 // pred_fallthru
      _
    // Predicated region
    $region6: #{tpu_custom_call.1} parent=1 // pred_check
      _
    $region7: #{tpu_custom_call.1} parent=1 // pred_check_branch
      %23 = sbr.rel (0) target = $region9
    $region8: #{tpu_custom_call.1} parent=1 // pred_region
      _
    $region9: #{tpu_custom_call.1} parent=1 // pred_fallthru
      _
    // Predicated region
    $region10: #{tpu_custom_call.1} parent=1 // pred_check
      _
    $region11: #{tpu_custom_call.1} parent=1 // pred_check_branch
      %25 = sbr.rel (0) target = $region13
    $region12: #{tpu_custom_call.1} parent=1 // pred_region
      _
    $region13: #{tpu_custom_call.1} parent=1 // pred_fallthru
      _
    // Predicated region
    $region14: #{tpu_custom_call.1} parent=1 // pred_check
      _
    $region15: #{tpu_custom_call.1} parent=1 // pred_check_branch
      %27 = sbr.rel (0) target = $region17
    $region16: #{tpu_custom_call.1} parent=1 // pred_region
      %s29 = ssub.s32 2048, 2048
      %30 = vsyncadd [#allocation4], %s29
      %s31 = sshll.u32 [#allocation3], 4
      %s32 = int_to_ptr.vmem [resolvable:$true] %s31
      %37 = dma.hbm_to_vmem [thread:$0]  %s3, 2048, %s32, [#allocation4], 128, 128, 8
    $region17: #{tpu_custom_call.1} parent=1 // pred_fallthru
      _
    // Predicated region
    $region18: #{tpu_custom_call.1} parent=1 // pred_check
      _
    $region19: #{tpu_custom_call.1} parent=1 // pred_check_branch
      %39 = sbr.rel (0) target = $region21
    $region20: #{tpu_custom_call.1} parent=1 // pred_region
      _
    $region21: #{tpu_custom_call.1} parent=1 // pred_fallthru
      _
    // Predicated region
    $region22: #{tpu_custom_call.1} parent=1 // pred_check
      _
    $region23: #{tpu_custom_call.1} parent=1 // pred_check_branch
      %41 = sbr.rel (0) target = $region25
    $region24: #{tpu_custom_call.1} parent=1 // pred_region
      %s43 = ssub.s32 2048, 2048
      %44 = vsyncadd [#allocation6], %s43
      %s45 = sshll.u32 [#allocation5], 4
      %s46 = int_to_ptr.vmem [resolvable:$true] %s45
      %51 = dma.hbm_to_vmem [thread:$0]  %s5, 2048, %s46, [#allocation6], 128, 128, 8
    $region25: #{tpu_custom_call.1} parent=1 // pred_fallthru
      _
    // Predicated region
    $region26: #{tpu_custom_call.1} parent=1 // pred_check
      _
    $region27: #{tpu_custom_call.1} parent=1 // pred_check_branch
      %53 = sbr.rel (0) target = $region29
    $region28: #{tpu_custom_call.1} parent=1 // pred_region
      _
    $region29: #{tpu_custom_call.1} parent=1 // pred_fallthru
      _
    // Predicated region
    $region30: #{tpu_custom_call.1} parent=1 // pred_check
      _
    $region31: #{tpu_custom_call.1} parent=1 // pred_check_branch
      %55 = sbr.rel (0) target = $region33
    $region32: #{tpu_custom_call.1} parent=1 // pred_region
      %s57 = ssub.s32 2048, 2048
      %58 = vsyncadd [#allocation6], %s57
      %s59 = sshll.u32 [#allocation7], 4
      %s60 = int_to_ptr.vmem [resolvable:$true] %s59
      %65 = dma.hbm_to_vmem [thread:$0]  %s7, 2048, %s60, [#allocation6], 128, 128, 8
    $region33: #{tpu_custom_call.1} parent=1 // pred_fallthru
      _
    // Predicated region
    $region34: #{tpu_custom_call.1} parent=1 // pred_check
      _
    $region35: #{tpu_custom_call.1} parent=1 // pred_check_branch
      %67 = sbr.rel (0) target = $region37
    $region36: #{tpu_custom_call.1} parent=1 // pred_region
      _
    $region37: #{tpu_custom_call.1} parent=1 // pred_fallthru
      _
    // Predicated region
    $region38: #{tpu_custom_call.1} parent=1 // pred_check
      _
    $region39: #{tpu_custom_call.1} parent=1 // pred_check_branch
      %69 = sbr.rel (0) target = $region41
    $region40: #{tpu_custom_call.1} parent=1 // pred_region
      _
    $region41: #{tpu_custom_call.1} parent=1 // pred_fallthru
      _
    // Predicated region
    $region42: #{tpu_custom_call.1} parent=1 // pred_check
      _
    $region43: #{tpu_custom_call.1} parent=1 // pred_check_branch
      %71 = sbr.rel (0) target = $region45
    $region44: #{tpu_custom_call.1} parent=1 // pred_region
      _
    $region45: #{tpu_custom_call.1} parent=1 // pred_fallthru
      _
    // Predicated region
    $region46: #{tpu_custom_call.1} parent=1 // pred_check
      _
    $region47: #{tpu_custom_call.1} parent=1 // pred_check_branch
      %73 = sbr.rel (0) target = $region49
    $region48: #{tpu_custom_call.1} parent=1 // pred_region
      %74 = dma.done [#allocation4], 2048
    $region49: #{tpu_custom_call.1} parent=1 // pred_fallthru
      _
    // Predicated region
    $region50: #{tpu_custom_call.1} parent=1 // pred_check
      _
    $region51: #{tpu_custom_call.1} parent=1 // pred_check_branch
      %76 = sbr.rel (0) target = $region53
    $region52: #{tpu_custom_call.1} parent=1 // pred_region
      %77 = dma.done [#allocation6], 2048
    $region53: #{tpu_custom_call.1} parent=1 // pred_fallthru
      _
    // Predicated region
    $region54: #{tpu_custom_call.1} parent=1 // pred_check
      _
    $region55: #{tpu_custom_call.1} parent=1 // pred_check_branch
      %79 = sbr.rel (0) target = $region57
    $region56: #{tpu_custom_call.1} parent=1 // pred_region
      %80 = dma.done [#allocation6], 2048
    $region57: #{tpu_custom_call.1} parent=1 // pred_fallthru
      _
    %v81 = vld [vmem:[%s0] sm:$0xff]
    %v82 = vld [vmem:[%s0 + $0x8] sm:$0xff]
    %v83 = vld [vmem:[%s0 + $0x10] sm:$0xff]
    %v84 = vld [vmem:[%s0 + $0x18] sm:$0xff]
    %v85 = vld [vmem:[%s0 + $0x20] sm:$0xff]
    %v86 = vld [vmem:[%s0 + $0x28] sm:$0xff]
    %v87 = vld [vmem:[%s0 + $0x30] sm:$0xff]
    %v88 = vld [vmem:[%s0 + $0x38] sm:$0xff]
    %v89 = vld [vmem:[%s1] sm:$0x1]
    %91 = vset.pattern.permute.xlu0 0
    %92 = vperm.xlu0 %91, %v81
    %v93 = vpop.permute.xlu0 %92
    %96 = vset.pattern.permute.xlu0 0
    %97 = vperm.xlu0 %96, %v82
    %v98 = vpop.permute.xlu0 %97
    %101 = vset.pattern.permute.xlu0 0
    %102 = vperm.xlu0 %101, %v83
    %v103 = vpop.permute.xlu0 %102
    %106 = vset.pattern.permute.xlu0 0
    %107 = vperm.xlu0 %106, %v84
    %v108 = vpop.permute.xlu0 %107
    %111 = vset.pattern.permute.xlu0 0
    %112 = vperm.xlu0 %111, %v85
    %v113 = vpop.permute.xlu0 %112
    %116 = vset.pattern.permute.xlu0 0
    %117 = vperm.xlu0 %116, %v86
    %v118 = vpop.permute.xlu0 %117
    %121 = vset.pattern.permute.xlu0 0
    %122 = vperm.xlu0 %121, %v87
    %v123 = vpop.permute.xlu0 %122
    %126 = vset.pattern.permute.xlu0 0
    %127 = vperm.xlu0 %126, %v88
    %v128 = vpop.permute.xlu0 %127
    %v131 = vlaneseq
    %v132 = vshrl.u32 %v131, 7
    %v133 = vsub.s32 0, %v132
    %v134 = vrot.slane %v89, %v133
    %v136 = vmul.f32 %v93, %v134
    %v137 = vmul.f32 %v98, %v134
    %v138 = vmul.f32 %v103, %v134
    %v139 = vmul.f32 %v108, %v134
    %v140 = vmul.f32 %v113, %v134
    %v141 = vmul.f32 %v118, %v134
    %v142 = vmul.f32 %v123, %v134
    %v143 = vmul.f32 %v128, %v134
    %v144 = vld [vmem:[%s2] sm:$0x1]
    %v146 = vlaneseq
    %v147 = vshrl.u32 %v146, 7
    %v148 = vsub.s32 0, %v147
    %v149 = vrot.slane %v144, %v148
    %v151 = vadd.f32 %v136, %v149
    %v152 = vadd.f32 %v137, %v149
    %v153 = vadd.f32 %v138, %v149
    %v154 = vadd.f32 %v139, %v149
    %v155 = vadd.f32 %v140, %v149
    %v156 = vadd.f32 %v141, %v149
    %v157 = vadd.f32 %v142, %v149
    %v158 = vadd.f32 %v143, %v149
    %v159 = vmax.f32 %v151, 0.0
    %v160 = vmax.f32 %v152, 0.0
    %v161 = vmax.f32 %v153, 0.0
    %v162 = vmax.f32 %v154, 0.0
    %v163 = vmax.f32 %v155, 0.0
    %v164 = vmax.f32 %v156, 0.0
    %v165 = vmax.f32 %v157, 0.0
    %v166 = vmax.f32 %v158, 0.0
    %v167 = vld [vmem:[#allocation3] sm:$0xff]
    %v168 = vld [vmem:[#allocation3 + $0x8] sm:$0xff]
    %v169 = vld [vmem:[#allocation3 + $0x10] sm:$0xff]
    %v170 = vld [vmem:[#allocation3 + $0x18] sm:$0xff]
    %v171 = vld [vmem:[#allocation3 + $0x20] sm:$0xff]
    %v172 = vld [vmem:[#allocation3 + $0x28] sm:$0xff]
    %v173 = vld [vmem:[#allocation3 + $0x30] sm:$0xff]
    %v174 = vld [vmem:[#allocation3 + $0x38] sm:$0xff]
    %v175 = vld [vmem:[#allocation3 + $0x40] sm:$0xff]
    %v176 = vld [vmem:[#allocation3 + $0x48] sm:$0xff]
    %v177 = vld [vmem:[#allocation3 + $0x50] sm:$0xff]
    %v178 = vld [vmem:[#allocation3 + $0x58] sm:$0xff]
    %v179 = vld [vmem:[#allocation3 + $0x60] sm:$0xff]
    %v180 = vld [vmem:[#allocation3 + $0x68] sm:$0xff]
    %v181 = vld [vmem:[#allocation3 + $0x70] sm:$0xff]
    %v182 = vld [vmem:[#allocation3 + $0x78] sm:$0xff]
    %v183 = vld [vmem:[%s4] sm:$0x1]
    %v185 = vlaneseq
    %v186 = vshrl.u32 %v185, 7
    %v187 = vsub.s32 0, %v186
    %v188 = vrot.slane %v183, %v187
    %190 = vmatprep.subr.mxu0 0.0
    %191 = vmatpush1.msra.mxu0 %v167
    %192 = vmatprep.subr.mxu0 0.0
    %193 = vmatpush1.msra.mxu0 %v168
    %194 = vmatprep.subr.mxu0 0.0
    %195 = vmatpush1.msra.mxu0 %v169
    %196 = vmatprep.subr.mxu0 0.0
    %197 = vmatpush1.msra.mxu0 %v170
    %198 = vmatprep.subr.mxu0 0.0
    %199 = vmatpush1.msra.mxu0 %v171
    %200 = vmatprep.subr.mxu0 0.0
    %201 = vmatpush1.msra.mxu0 %v172
    %202 = vmatprep.subr.mxu0 0.0
    %203 = vmatpush1.msra.mxu0 %v173
    %204 = vmatprep.subr.mxu0 0.0
    %205 = vmatpush1.msra.mxu0 %v174
    %206 = vmatprep.subr.mxu0 0.0
    %207 = vmatpush1.msra.mxu0 %v175
    %208 = vmatprep.subr.mxu0 0.0
    %209 = vmatpush1.msra.mxu0 %v176
    %210 = vmatprep.subr.mxu0 0.0
    %211 = vmatpush1.msra.mxu0 %v177
    %212 = vmatprep.subr.mxu0 0.0
    %213 = vmatpush1.msra.mxu0 %v178
    %214 = vmatprep.subr.mxu0 0.0
    %215 = vmatpush1.msra.mxu0 %v179
    %216 = vmatprep.subr.mxu0 0.0
    %217 = vmatpush1.msra.mxu0 %v180
    %218 = vmatprep.subr.mxu0 0.0
    %219 = vmatpush1.msra.mxu0 %v181
    %220 = vmatprep.subr.mxu0 0.0
    %221 = vmatpush1.msra.mxu0 %v182
    %222 = vmatprep.subr.mxu0 0.0
    %223 = vmatpush1.msra.mxu0 0.0
    %224 = vmatprep.subr.mxu0 0.0
    %225 = vmatpush1.msra.mxu0 0.0
    %226 = vmatprep.subr.mxu0 0.0
    %227 = vmatpush1.msra.mxu0 0.0
    %228 = vmatprep.subr.mxu0 0.0
    %229 = vmatpush1.msra.mxu0 0.0
    %230 = vmatprep.subr.mxu0 0.0
    %231 = vmatpush1.msra.mxu0 0.0
    %232 = vmatprep.subr.mxu0 0.0
    %233 = vmatpush1.msra.mxu0 0.0
    %234 = vmatprep.subr.mxu0 0.0
    %235 = vmatpush1.msra.mxu0 0.0
    %236 = vmatprep.subr.mxu0 0.0
    %237 = vmatpush1.msra.mxu0 0.0
    %238 = vmatprep.subr.mxu0 0.0
    %239 = vmatpush1.msra.mxu0 0.0
    %240 = vmatprep.subr.mxu0 0.0
    %241 = vmatpush1.msra.mxu0 0.0
    %242 = vmatprep.subr.mxu0 0.0
    %243 = vmatpush1.msra.mxu0 0.0
    %244 = vmatprep.subr.mxu0 0.0
    %245 = vmatpush1.msra.mxu0 0.0
    %246 = vmatprep.subr.mxu0 0.0
    %247 = vmatpush1.msra.mxu0 0.0
    %248 = vmatprep.subr.mxu0 0.0
    %249 = vmatpush1.msra.mxu0 0.0
    %250 = vmatprep.subr.mxu0 0.0
    %251 = vmatpush1.msra.mxu0 0.0
    %252 = vmatprep.subr.mxu0 0.0
    %253 = vmatpush1.msra.mxu0 0.0
    %254 = vmatprep.mubr.f32.mxu0 0.0
    %255 = vmatmul.mubr.f32.gmra.mrb[0].mxu0 %v159
    %v256 = vpop.f32.mrb[0].mxu0
    %v257 = vadd.f32 %v188, %v256
    %v258 = vpop.f32.mrb[0].mxu0
    %259 = vmatprep.mubr.f32.mxu0 0.0
    %260 = vmatmul.mubr.f32.gmra.mrb[0].mxu0 %v160
    %v261 = vpop.f32.mrb[0].mxu0
    %v262 = vadd.f32 %v188, %v261
    %v263 = vpop.f32.mrb[0].mxu0
    %264 = vmatprep.mubr.f32.mxu0 0.0
    %265 = vmatmul.mubr.f32.gmra.mrb[0].mxu0 %v161
    %v266 = vpop.f32.mrb[0].mxu0
    %v267 = vadd.f32 %v188, %v266
    %v268 = vpop.f32.mrb[0].mxu0
    %269 = vmatprep.mubr.f32.mxu0 0.0
    %270 = vmatmul.mubr.f32.gmra.mrb[0].mxu0 %v162
    %v271 = vpop.f32.mrb[0].mxu0
    %v272 = vadd.f32 %v188, %v271
    %v273 = vpop.f32.mrb[0].mxu0
    %274 = vmatprep.mubr.f32.mxu0 0.0
    %275 = vmatmul.mubr.f32.gmra.mrb[0].mxu0 %v163
    %v276 = vpop.f32.mrb[0].mxu0
    %v277 = vadd.f32 %v188, %v276
    %v278 = vpop.f32.mrb[0].mxu0
    %279 = vmatprep.mubr.f32.mxu0 0.0
    %280 = vmatmul.mubr.f32.gmra.mrb[0].mxu0 %v164
    %v281 = vpop.f32.mrb[0].mxu0
    %v282 = vadd.f32 %v188, %v281
    %v283 = vpop.f32.mrb[0].mxu0
    %284 = vmatprep.mubr.f32.mxu0 0.0
    %285 = vmatmul.mubr.f32.gmra.mrb[0].mxu0 %v165
    %v286 = vpop.f32.mrb[0].mxu0
    %v287 = vadd.f32 %v188, %v286
    %v288 = vpop.f32.mrb[0].mxu0
    %289 = vmatprep.mubr.f32.mxu0 0.0
    %290 = vmatmul.mubr.f32.gmra.mrb[0].mxu0 %v166
    %v291 = vpop.f32.mrb[0].mxu0
    %v292 = vadd.f32 %v188, %v291
    %v293 = vpop.f32.mrb[0].mxu0
    %294 = vdwg.mxu0
    %v295 = vmax.f32 %v257, 0.0
    %v296 = vmax.f32 %v262, 0.0
    %v297 = vmax.f32 %v267, 0.0
    %v298 = vmax.f32 %v272, 0.0
    %v299 = vmax.f32 %v277, 0.0
    %v300 = vmax.f32 %v282, 0.0
    %v301 = vmax.f32 %v287, 0.0
    %v302 = vmax.f32 %v292, 0.0
    %v303 = vld [vmem:[#allocation5] sm:$0xff]
    %v304 = vld [vmem:[#allocation5 + $0x8] sm:$0xff]
    %v305 = vld [vmem:[#allocation5 + $0x10] sm:$0xff]
    %v306 = vld [vmem:[#allocation5 + $0x18] sm:$0xff]
    %v307 = vld [vmem:[#allocation5 + $0x20] sm:$0xff]
    %v308 = vld [vmem:[#allocation5 + $0x28] sm:$0xff]
    %v309 = vld [vmem:[#allocation5 + $0x30] sm:$0xff]
    %v310 = vld [vmem:[#allocation5 + $0x38] sm:$0xff]
    %v311 = vld [vmem:[#allocation5 + $0x40] sm:$0xff]
    %v312 = vld [vmem:[#allocation5 + $0x48] sm:$0xff]
    %v313 = vld [vmem:[#allocation5 + $0x50] sm:$0xff]
    %v314 = vld [vmem:[#allocation5 + $0x58] sm:$0xff]
    %v315 = vld [vmem:[#allocation5 + $0x60] sm:$0xff]
    %v316 = vld [vmem:[#allocation5 + $0x68] sm:$0xff]
    %v317 = vld [vmem:[#allocation5 + $0x70] sm:$0xff]
    %v318 = vld [vmem:[#allocation5 + $0x78] sm:$0xff]
    %v319 = vld [vmem:[%s6] sm:$0x1]
    %v321 = vlaneseq
    %v322 = vshrl.u32 %v321, 7
    %v323 = vsub.s32 0, %v322
    %v324 = vrot.slane %v319, %v323
    %326 = vmatprep.subr.mxu0 0.0
    %327 = vmatpush1.msra.mxu0 %v303
    %328 = vmatprep.subr.mxu0 0.0
    %329 = vmatpush1.msra.mxu0 %v304
    %330 = vmatprep.subr.mxu0 0.0
    %331 = vmatpush1.msra.mxu0 %v305
    %332 = vmatprep.subr.mxu0 0.0
    %333 = vmatpush1.msra.mxu0 %v306
    %334 = vmatprep.subr.mxu0 0.0
    %335 = vmatpush1.msra.mxu0 %v307
    %336 = vmatprep.subr.mxu0 0.0
    %337 = vmatpush1.msra.mxu0 %v308
    %338 = vmatprep.subr.mxu0 0.0
    %339 = vmatpush1.msra.mxu0 %v309
    %340 = vmatprep.subr.mxu0 0.0
    %341 = vmatpush1.msra.mxu0 %v310
    %342 = vmatprep.subr.mxu0 0.0
    %343 = vmatpush1.msra.mxu0 %v311
    %344 = vmatprep.subr.mxu0 0.0
    %345 = vmatpush1.msra.mxu0 %v312
    %346 = vmatprep.subr.mxu0 0.0
    %347 = vmatpush1.msra.mxu0 %v313
    %348 = vmatprep.subr.mxu0 0.0
    %349 = vmatpush1.msra.mxu0 %v314
    %350 = vmatprep.subr.mxu0 0.0
    %351 = vmatpush1.msra.mxu0 %v315
    %352 = vmatprep.subr.mxu0 0.0
    %353 = vmatpush1.msra.mxu0 %v316
    %354 = vmatprep.subr.mxu0 0.0
    %355 = vmatpush1.msra.mxu0 %v317
    %356 = vmatprep.subr.mxu0 0.0
    %357 = vmatpush1.msra.mxu0 %v318
    %358 = vmatprep.subr.mxu0 0.0
    %359 = vmatpush1.msra.mxu0 0.0
    %360 = vmatprep.subr.mxu0 0.0
    %361 = vmatpush1.msra.mxu0 0.0
    %362 = vmatprep.subr.mxu0 0.0
    %363 = vmatpush1.msra.mxu0 0.0
    %364 = vmatprep.subr.mxu0 0.0
    %365 = vmatpush1.msra.mxu0 0.0
    %366 = vmatprep.subr.mxu0 0.0
    %367 = vmatpush1.msra.mxu0 0.0
    %368 = vmatprep.subr.mxu0 0.0
    %369 = vmatpush1.msra.mxu0 0.0
    %370 = vmatprep.subr.mxu0 0.0
    %371 = vmatpush1.msra.mxu0 0.0
    %372 = vmatprep.subr.mxu0 0.0
    %373 = vmatpush1.msra.mxu0 0.0
    %374 = vmatprep.subr.mxu0 0.0
    %375 = vmatpush1.msra.mxu0 0.0
    %376 = vmatprep.subr.mxu0 0.0
    %377 = vmatpush1.msra.mxu0 0.0
    %378 = vmatprep.subr.mxu0 0.0
    %379 = vmatpush1.msra.mxu0 0.0
    %380 = vmatprep.subr.mxu0 0.0
    %381 = vmatpush1.msra.mxu0 0.0
    %382 = vmatprep.subr.mxu0 0.0
    %383 = vmatpush1.msra.mxu0 0.0
    %384 = vmatprep.subr.mxu0 0.0
    %385 = vmatpush1.msra.mxu0 0.0
    %386 = vmatprep.subr.mxu0 0.0
    %387 = vmatpush1.msra.mxu0 0.0
    %388 = vmatprep.subr.mxu0 0.0
    %389 = vmatpush1.msra.mxu0 0.0
    %390 = vmatprep.mubr.f32.mxu0 0.0
    %391 = vmatmul.mubr.f32.gmra.mrb[0].mxu0 %v295
    %v392 = vpop.f32.mrb[0].mxu0
    %v393 = vadd.f32 %v324, %v392
    %v394 = vpop.f32.mrb[0].mxu0
    %395 = vmatprep.mubr.f32.mxu0 0.0
    %396 = vmatmul.mubr.f32.gmra.mrb[0].mxu0 %v296
    %v397 = vpop.f32.mrb[0].mxu0
    %v398 = vadd.f32 %v324, %v397
    %v399 = vpop.f32.mrb[0].mxu0
    %400 = vmatprep.mubr.f32.mxu0 0.0
    %401 = vmatmul.mubr.f32.gmra.mrb[0].mxu0 %v297
    %v402 = vpop.f32.mrb[0].mxu0
    %v403 = vadd.f32 %v324, %v402
    %v404 = vpop.f32.mrb[0].mxu0
    %405 = vmatprep.mubr.f32.mxu0 0.0
    %406 = vmatmul.mubr.f32.gmra.mrb[0].mxu0 %v298
    %v407 = vpop.f32.mrb[0].mxu0
    %v408 = vadd.f32 %v324, %v407
    %v409 = vpop.f32.mrb[0].mxu0
    %410 = vmatprep.mubr.f32.mxu0 0.0
    %411 = vmatmul.mubr.f32.gmra.mrb[0].mxu0 %v299
    %v412 = vpop.f32.mrb[0].mxu0
    %v413 = vadd.f32 %v324, %v412
    %v414 = vpop.f32.mrb[0].mxu0
    %415 = vmatprep.mubr.f32.mxu0 0.0
    %416 = vmatmul.mubr.f32.gmra.mrb[0].mxu0 %v300
    %v417 = vpop.f32.mrb[0].mxu0
    %v418 = vadd.f32 %v324, %v417
    %v419 = vpop.f32.mrb[0].mxu0
    %420 = vmatprep.mubr.f32.mxu0 0.0
    %421 = vmatmul.mubr.f32.gmra.mrb[0].mxu0 %v301
    %v422 = vpop.f32.mrb[0].mxu0
    %v423 = vadd.f32 %v324, %v422
    %v424 = vpop.f32.mrb[0].mxu0
    %425 = vmatprep.mubr.f32.mxu0 0.0
    %426 = vmatmul.mubr.f32.gmra.mrb[0].mxu0 %v302
    %v427 = vpop.f32.mrb[0].mxu0
    %v428 = vadd.f32 %v324, %v427
    %v429 = vpop.f32.mrb[0].mxu0
    %430 = vdwg.mxu0
    %v431 = vmax.f32 %v393, 0.0
    %v432 = vmax.f32 %v398, 0.0
    %v433 = vmax.f32 %v403, 0.0
    %v434 = vmax.f32 %v408, 0.0
    %v435 = vmax.f32 %v413, 0.0
    %v436 = vmax.f32 %v418, 0.0
    %v437 = vmax.f32 %v423, 0.0
    %v438 = vmax.f32 %v428, 0.0
    %v439 = vld [vmem:[#allocation7] sm:$0xff]
    %v440 = vld [vmem:[#allocation7 + $0x8] sm:$0xff]
    %v441 = vld [vmem:[#allocation7 + $0x10] sm:$0xff]
    %v442 = vld [vmem:[#allocation7 + $0x18] sm:$0xff]
    %v443 = vld [vmem:[#allocation7 + $0x20] sm:$0xff]
    %v444 = vld [vmem:[#allocation7 + $0x28] sm:$0xff]
    %v445 = vld [vmem:[#allocation7 + $0x30] sm:$0xff]
    %v446 = vld [vmem:[#allocation7 + $0x38] sm:$0xff]
    %v447 = vld [vmem:[#allocation7 + $0x40] sm:$0xff]
    %v448 = vld [vmem:[#allocation7 + $0x48] sm:$0xff]
    %v449 = vld [vmem:[#allocation7 + $0x50] sm:$0xff]
    %v450 = vld [vmem:[#allocation7 + $0x58] sm:$0xff]
    %v451 = vld [vmem:[#allocation7 + $0x60] sm:$0xff]
    %v452 = vld [vmem:[#allocation7 + $0x68] sm:$0xff]
    %v453 = vld [vmem:[#allocation7 + $0x70] sm:$0xff]
    %v454 = vld [vmem:[#allocation7 + $0x78] sm:$0xff]
    %v455 = vld [vmem:[%s8] sm:$0x1]
    %v457 = vlaneseq
    %v458 = vshrl.u32 %v457, 7
    %v459 = vsub.s32 0, %v458
    %v460 = vrot.slane %v455, %v459
    %462 = vmatprep.subr.mxu0 0.0
    %463 = vmatpush1.msra.mxu0 %v439
    %464 = vmatprep.subr.mxu0 0.0
    %465 = vmatpush1.msra.mxu0 %v440
    %466 = vmatprep.subr.mxu0 0.0
    %467 = vmatpush1.msra.mxu0 %v441
    %468 = vmatprep.subr.mxu0 0.0
    %469 = vmatpush1.msra.mxu0 %v442
    %470 = vmatprep.subr.mxu0 0.0
    %471 = vmatpush1.msra.mxu0 %v443
    %472 = vmatprep.subr.mxu0 0.0
    %473 = vmatpush1.msra.mxu0 %v444
    %474 = vmatprep.subr.mxu0 0.0
    %475 = vmatpush1.msra.mxu0 %v445
    %476 = vmatprep.subr.mxu0 0.0
    %477 = vmatpush1.msra.mxu0 %v446
    %478 = vmatprep.subr.mxu0 0.0
    %479 = vmatpush1.msra.mxu0 %v447
    %480 = vmatprep.subr.mxu0 0.0
    %481 = vmatpush1.msra.mxu0 %v448
    %482 = vmatprep.subr.mxu0 0.0
    %483 = vmatpush1.msra.mxu0 %v449
    %484 = vmatprep.subr.mxu0 0.0
    %485 = vmatpush1.msra.mxu0 %v450
    %486 = vmatprep.subr.mxu0 0.0
    %487 = vmatpush1.msra.mxu0 %v451
    %488 = vmatprep.subr.mxu0 0.0
    %489 = vmatpush1.msra.mxu0 %v452
    %490 = vmatprep.subr.mxu0 0.0
    %491 = vmatpush1.msra.mxu0 %v453
    %492 = vmatprep.subr.mxu0 0.0
    %493 = vmatpush1.msra.mxu0 %v454
    %494 = vmatprep.subr.mxu0 0.0
    %495 = vmatpush1.msra.mxu0 0.0
    %496 = vmatprep.subr.mxu0 0.0
    %497 = vmatpush1.msra.mxu0 0.0
    %498 = vmatprep.subr.mxu0 0.0
    %499 = vmatpush1.msra.mxu0 0.0
    %500 = vmatprep.subr.mxu0 0.0
    %501 = vmatpush1.msra.mxu0 0.0
    %502 = vmatprep.subr.mxu0 0.0
    %503 = vmatpush1.msra.mxu0 0.0
    %504 = vmatprep.subr.mxu0 0.0
    %505 = vmatpush1.msra.mxu0 0.0
    %506 = vmatprep.subr.mxu0 0.0
    %507 = vmatpush1.msra.mxu0 0.0
    %508 = vmatprep.subr.mxu0 0.0
    %509 = vmatpush1.msra.mxu0 0.0
    %510 = vmatprep.subr.mxu0 0.0
    %511 = vmatpush1.msra.mxu0 0.0
    %512 = vmatprep.subr.mxu0 0.0
    %513 = vmatpush1.msra.mxu0 0.0
    %514 = vmatprep.subr.mxu0 0.0
    %515 = vmatpush1.msra.mxu0 0.0
    %516 = vmatprep.subr.mxu0 0.0
    %517 = vmatpush1.msra.mxu0 0.0
    %518 = vmatprep.subr.mxu0 0.0
    %519 = vmatpush1.msra.mxu0 0.0
    %520 = vmatprep.subr.mxu0 0.0
    %521 = vmatpush1.msra.mxu0 0.0
    %522 = vmatprep.subr.mxu0 0.0
    %523 = vmatpush1.msra.mxu0 0.0
    %524 = vmatprep.subr.mxu0 0.0
    %525 = vmatpush1.msra.mxu0 0.0
    %526 = vmatprep.mubr.f32.mxu0 0.0
    %527 = vmatmul.mubr.f32.gmra.mrb[0].mxu0 %v431
    %v528 = vpop.f32.mrb[0].mxu0
    %v529 = vadd.f32 %v460, %v528
    %v530 = vpop.f32.mrb[0].mxu0
    %531 = vmatprep.mubr.f32.mxu0 0.0
    %532 = vmatmul.mubr.f32.gmra.mrb[0].mxu0 %v432
    %v533 = vpop.f32.mrb[0].mxu0
    %v534 = vadd.f32 %v460, %v533
    %v535 = vpop.f32.mrb[0].mxu0
    %536 = vmatprep.mubr.f32.mxu0 0.0
    %537 = vmatmul.mubr.f32.gmra.mrb[0].mxu0 %v433
    %v538 = vpop.f32.mrb[0].mxu0
    %v539 = vadd.f32 %v460, %v538
    %v540 = vpop.f32.mrb[0].mxu0
    %541 = vmatprep.mubr.f32.mxu0 0.0
    %542 = vmatmul.mubr.f32.gmra.mrb[0].mxu0 %v434
    %v543 = vpop.f32.mrb[0].mxu0
    %v544 = vadd.f32 %v460, %v543
    %v545 = vpop.f32.mrb[0].mxu0
    %546 = vmatprep.mubr.f32.mxu0 0.0
    %547 = vmatmul.mubr.f32.gmra.mrb[0].mxu0 %v435
    %v548 = vpop.f32.mrb[0].mxu0
    %v549 = vadd.f32 %v460, %v548
    %v550 = vpop.f32.mrb[0].mxu0
    %551 = vmatprep.mubr.f32.mxu0 0.0
    %552 = vmatmul.mubr.f32.gmra.mrb[0].mxu0 %v436
    %v553 = vpop.f32.mrb[0].mxu0
    %v554 = vadd.f32 %v460, %v553
    %v555 = vpop.f32.mrb[0].mxu0
    %556 = vmatprep.mubr.f32.mxu0 0.0
    %557 = vmatmul.mubr.f32.gmra.mrb[0].mxu0 %v437
    %v558 = vpop.f32.mrb[0].mxu0
    %v559 = vadd.f32 %v460, %v558
    %v560 = vpop.f32.mrb[0].mxu0
    %561 = vmatprep.mubr.f32.mxu0 0.0
    %562 = vmatmul.mubr.f32.gmra.mrb[0].mxu0 %v438
    %v563 = vpop.f32.mrb[0].mxu0
    %v564 = vadd.f32 %v460, %v563
    %v565 = vpop.f32.mrb[0].mxu0
    %566 = vdwg.mxu0
    %v567 = vmax.f32 %v529, 0.0
    %v568 = vmax.f32 %v534, 0.0
    %v569 = vmax.f32 %v539, 0.0
    %v570 = vmax.f32 %v544, 0.0
    %v571 = vmax.f32 %v549, 0.0
    %v572 = vmax.f32 %v554, 0.0
    %v573 = vmax.f32 %v559, 0.0
    %v574 = vmax.f32 %v564, 0.0
    %v575 = vld [vmem:[%s9] sm:$0x1]
    %v577 = vlaneseq
    %v578 = vshrl.u32 %v577, 7
    %v579 = vsub.s32 0, %v578
    %v580 = vrot.slane %v575, %v579
    %v582 = vmul.f32 %v567, %v580
    %v583 = vmul.f32 %v568, %v580
    %v584 = vmul.f32 %v569, %v580
    %v585 = vmul.f32 %v570, %v580
    %v586 = vmul.f32 %v571, %v580
    %v587 = vmul.f32 %v572, %v580
    %v588 = vmul.f32 %v573, %v580
    %v589 = vmul.f32 %v574, %v580
    %590 = vadd.xlane.f32.xlu0 %v582
    %v591 = vpop.xlane.xlu0 %590
    %592 = vadd.xlane.f32.xlu0 %v583
    %v593 = vpop.xlane.xlu0 %592
    %594 = vadd.xlane.f32.xlu0 %v584
    %v595 = vpop.xlane.xlu0 %594
    %596 = vadd.xlane.f32.xlu0 %v585
    %v597 = vpop.xlane.xlu0 %596
    %598 = vadd.xlane.f32.xlu0 %v586
    %v599 = vpop.xlane.xlu0 %598
    %600 = vadd.xlane.f32.xlu0 %v587
    %v601 = vpop.xlane.xlu0 %600
    %602 = vadd.xlane.f32.xlu0 %v588
    %v603 = vpop.xlane.xlu0 %602
    %604 = vadd.xlane.f32.xlu0 %v589
    %v605 = vpop.xlane.xlu0 %604
    %v606 = vld [vmem:[#allocation2] sm:$0x1]
    %v608 = vlaneseq
    %v609 = vshrl.u32 %v608, 7
    %v610 = vsub.s32 0, %v609
    %v611 = vrot.slane %v606, %v610
    %v613 = vadd.f32 %v591, %v611
    %v614 = vadd.f32 %v593, %v611
    %v615 = vadd.f32 %v595, %v611
    %v616 = vadd.f32 %v597, %v611
    %v617 = vadd.f32 %v599, %v611
    %v618 = vadd.f32 %v601, %v611
    %v619 = vadd.f32 %v603, %v611
    %v620 = vadd.f32 %v605, %v611
    %vm621 = vcmask 7168
    %622 = vst.msk [vmem:[%s11] sm:$0xff] %vm621, %v613
    %623 = vst.msk [vmem:[%s11 + $0x8] sm:$0xff] %vm621, %v614
    %624 = vst.msk [vmem:[%s11 + $0x10] sm:$0xff] %vm621, %v615
    %625 = vst.msk [vmem:[%s11 + $0x18] sm:$0xff] %vm621, %v616
    %626 = vst.msk [vmem:[%s11 + $0x20] sm:$0xff] %vm621, %v617
    %627 = vst.msk [vmem:[%s11 + $0x28] sm:$0xff] %vm621, %v618
    %628 = vst.msk [vmem:[%s11 + $0x30] sm:$0xff] %vm621, %v619
    %629 = vst.msk [vmem:[%s11 + $0x38] sm:$0xff] %vm621, %v620
    // Predicated region
    $region58: #{tpu_custom_call.1} parent=1 // pred_check
      _
    $region59: #{tpu_custom_call.1} parent=1 // pred_check_branch
      %631 = sbr.rel (0) target = $region61
    $region60: #{tpu_custom_call.1} parent=1 // pred_region
      _
    $region61: #{tpu_custom_call.1} parent=1 // pred_fallthru
      _
    // Predicated region
    $region62: #{tpu_custom_call.1} parent=1 // pred_check
      _
    $region63: #{tpu_custom_call.1} parent=1 // pred_check_branch
      %633 = sbr.rel (0) target = $region65
    $region64: #{tpu_custom_call.1} parent=1 // pred_region
      _
    $region65: #{tpu_custom_call.1} parent=1 // pred_fallthru
      _
    %634 = vsyncpa [#allocation4], 1
    %635 = vsyncpa [#allocation6], 1

</llo_original>
